<compile_context>
chip_gen: v5e
topology: v5e:2x2
jax: 0.10.0
libtpu: 0.0.40
codegen_flags: <defaults>
</compile_context>

<pallas_src>
import functools

import jax
import jax.numpy as jnp
from jax.experimental import pallas as pl
from jax.experimental.pallas import tpu as pltpu

_LANE = 128
_DEFAULT_TILE_ROWS = 2048   # 2048 rows * 128 lanes * 4 B = 1 MiB per f32 channel
_MIN_GRID_STEPS = 8         # keep both v7x TensorCores fed for small inputs


def _unit_length_kernel(x_ref, o_ref, *, epsilon):
    # x_ref / o_ref: (1, C, TR, 128) block in VMEM.
    x = x_ref[...].astype(jnp.float32)
    # Channel reduction over the leading (non-tiled) axis -> dense VPU adds.
    sq_sum = jnp.sum(x * x, axis=1, keepdims=True)           # (1, 1, TR, 128)
    norm = jnp.sqrt(sq_sum) + epsilon                         # sqrt(.) + eps (matches torch)
    inv = pl.reciprocal(norm, approx=False)                   # exact recip; mem-bound anyway
    o_ref[...] = (x * inv).astype(o_ref.dtype)


def orientation_output_normalization(x, epsilon=1e-07, tile_rows=_DEFAULT_TILE_ROWS):
    """x: (N, C, H, W) array (NCHW, like the PyTorch module). Returns same shape."""
    n, c, h, w = x.shape
    hw = h * w
    itemsize = jnp.dtype(x.dtype).itemsize
    sublane = max(8, 32 // itemsize)          # 8 for f32, 16 for bf16, 32 for int8/fp8

    # ---- row layout: flattened spatial -> (rows, 128), pad only if hw % 128 != 0
    rows = pl.cdiv(hw, _LANE)
    hw_pad = rows * _LANE

    # ---- row-tile selection (sublane-aligned; ragged last block handled by Pallas)
    if rows <= tile_rows:
        tr = rows                              # full-extent block: any size is legal
    else:
        tr = max(sublane, (tile_rows // sublane) * sublane)

    # If the grid would be too small (starves v7x's 2 TensorCores), shrink the tile.
    while n * pl.cdiv(rows, tr) < _MIN_GRID_STEPS and tr > sublane:
        new_tr = max(sublane, ((tr // 2) // sublane) * sublane)
        if new_tr == tr:
            break
        tr = new_tr
    num_tiles = pl.cdiv(rows, tr)

    x_flat = x.reshape(n, c, hw)
    if hw_pad != hw:
        # Zero padding is safe: norm = sqrt(0) + eps, 0 / eps = 0 (no NaNs).
        x_flat = jnp.pad(x_flat, ((0, 0), (0, 0), (0, hw_pad - hw)))
    x4 = x_flat.reshape(n, c, rows, _LANE)

    kernel = functools.partial(_unit_length_kernel, epsilon=epsilon)

    # VMEM budget: in + out blocks, double-buffered.
    block_bytes = c * tr * _LANE * itemsize
    footprint = 4 * block_bytes
    cp_kwargs = dict(dimension_semantics=("parallel", "parallel"))
    if footprint > 12 * 1024 * 1024:
        # Only needed if a caller pushes tile_rows well past the default.
        cp_kwargs["vmem_limit_bytes"] = min(int(footprint * 1.5), 96 * 1024 * 1024)

    total_elems = n * c * rows * _LANE
    cost = pl.CostEstimate(
        flops=5 * total_elems,                      # square + channel-sum + add + scale
        transcendentals=2 * n * rows * _LANE,       # sqrt + reciprocal per spatial pos
        bytes_accessed=2 * total_elems * itemsize,  # one read + one write of the tensor
    )

    out = pl.pallas_call(
        kernel,
        out_shape=jax.ShapeDtypeStruct((n, c, rows, _LANE), x.dtype),
        grid_spec=pltpu.PrefetchScalarGridSpec(
            num_scalar_prefetch=0,
            grid=(n, num_tiles),
            in_specs=[pl.BlockSpec((1, c, tr, _LANE), lambda i, j: (i, 0, j, 0))],
            out_specs=pl.BlockSpec((1, c, tr, _LANE), lambda i, j: (i, 0, j, 0)),
        ),
        compiler_params=pltpu.CompilerParams(**cp_kwargs),
        cost_estimate=cost,
    )(x4)

    out = out.reshape(n, c, hw_pad)
    if hw_pad != hw:
        out = out[:, :, :hw]
    return out.reshape(n, c, h, w)


def _reference(x, epsilon=1e-07):
    norm = jnp.sqrt(jnp.sum(x * x, axis=1, keepdims=True)) + epsilon
    return x / norm


if __name__ == "__main__":
    key = jax.random.PRNGKey(0)
    k0, k1, k2 = jax.random.split(key, 3)

    # Orientation head outputs (sin, cos) -> 2 channels, NCHW.

    # Case 1: HW a 128-multiple (no padding, single full-extent row block).
    x_a = jax.random.normal(k0, (2, 2, 16, 16), dtype=jnp.float32)
    out_a = orientation_output_normalization(x_a)
    jax.block_until_ready(out_a)
    assert out_a.shape == x_a.shape
    assert jnp.allclose(out_a, _reference(x_a), atol=1e-5, rtol=1e-5), "mismatch (case 1)"

    # Case 2: HW not a 128-multiple (exercises the pad / slice-back path).
    x_b = jax.random.normal(k1, (2, 2, 20, 20), dtype=jnp.float32)
    out_b = orientation_output_normalization(x_b)
    jax.block_until_ready(out_b)
    assert out_b.shape == x_b.shape
    assert jnp.allclose(out_b, _reference(x_b), atol=1e-5, rtol=1e-5), "mismatch (case 2)"

    # Case 3: rows not a multiple of the row tile (exercises the ragged final block).
    x_c = jax.random.normal(k2, (1, 2, 30, 40), dtype=jnp.float32)   # hw=1200 -> rows=10
    out_c = orientation_output_normalization(x_c)
    jax.block_until_ready(out_c)
    assert out_c.shape == x_c.shape
    assert jnp.allclose(out_c, _reference(x_c), atol=1e-5, rtol=1e-5), "mismatch (case 3)"

    print("KERNEL_OK")
</pallas_src>

<mosaic_0001>
module attributes {stable_mosaic.version = 11 : i64} {
  func.func @_unit_length_kernel(%arg0: i32, %arg1: i32, %arg2: memref<1x2x2x128xf32, #tpu.memory_space<vmem>>, %arg3: memref<1x2x2x128xf32, #tpu.memory_space<vmem>>) attributes {dimension_semantics = [#tpu.dimension_semantics<parallel>, #tpu.dimension_semantics<parallel>], iteration_bounds = array<i64: 2, 1>, scalar_prefetch = 0 : i64, scratch_operands = 0 : i64, tpu.core_type = #tpu.core_type<tc>, window_params = [{transform_indices = @transform_0, window_bounds = array<i64: 1, 2, 2, 128>}, {transform_indices = @transform_1, window_bounds = array<i64: 1, 2, 2, 128>}]} {
    %c0 = arith.constant 0 : index
    %c0_0 = arith.constant 0 : index
    %c0_1 = arith.constant 0 : index
    %c0_2 = arith.constant 0 : index
    %0 = vector.load %arg2[%c0, %c0_0, %c0_1, %c0_2] : memref<1x2x2x128xf32, #tpu.memory_space<vmem>>, vector<1x2x2x128xf32>
    %1 = arith.mulf %0, %0 : vector<1x2x2x128xf32>
    %cst = arith.constant dense<0.000000e+00> : vector<1x2x128xf32>
    %2 = vector.multi_reduction <add>, %1, %cst [1] : vector<1x2x2x128xf32> to vector<1x2x128xf32>
    %3 = vector.shape_cast %2 : vector<1x2x128xf32> to vector<1x1x2x128xf32>
    %4 = math.sqrt %3 : vector<1x1x2x128xf32>
    %cst_3 = arith.constant 1.000000e-07 : f32
    %5 = vector.broadcast %cst_3 : f32 to vector<1x1x2x128xf32>
    %6 = arith.addf %4, %5 : vector<1x1x2x128xf32>
    %7 = tpu.reciprocal %6 : vector<1x1x2x128xf32> -> vector<1x1x2x128xf32>
    %8 = vector.broadcast %7 : vector<1x1x2x128xf32> to vector<1x2x2x128xf32>
    %9 = arith.mulf %0, %8 : vector<1x2x2x128xf32>
    %c0_4 = arith.constant 0 : index
    %c0_5 = arith.constant 0 : index
    %c0_6 = arith.constant 0 : index
    %c0_7 = arith.constant 0 : index
    %10 = vector.load %arg3[%c0_4, %c0_5, %c0_6, %c0_7] : memref<1x2x2x128xf32, #tpu.memory_space<vmem>>, vector<1x2x2x128xf32>
    tpu.vector_store %arg3[%c0_4, %c0_5, %c0_6, %c0_7], %9 {strides = array<i32>} : memref<1x2x2x128xf32, #tpu.memory_space<vmem>>, vector<1x2x2x128xf32>,
    return
  }
  func.func @transform_0(%arg0: i32, %arg1: i32) -> (i32, i32, i32, i32) {
    %c0_i32 = arith.constant 0 : i32
    %c0_i32_0 = arith.constant 0 : i32
    %c0_i32_1 = arith.constant 0 : i32
    return %arg0, %c0_i32, %arg1, %c0_i32_0 : i32, i32, i32, i32
  }
  func.func @transform_1(%arg0: i32, %arg1: i32) -> (i32, i32, i32, i32) {
    %c0_i32 = arith.constant 0 : i32
    %c0_i32_0 = arith.constant 0 : i32
    %c0_i32_1 = arith.constant 0 : i32
    return %arg0, %c0_i32, %arg1, %c0_i32_0 : i32, i32, i32, i32
  }
}

</mosaic_0001>

<llo_original>
// kernel: tpu_custom_call.1
$region0: #{tpu_custom_call.1}
  #allocation0 [shape = 'u32[]', space=smem, size = 0x4, offset = 0x4, fixed_abs, tag = 'smem constant byte address 0x4 - core index']
  #allocation1 [shape = 'u32[72,128]{1,0:T(1,128)}', space=vmem, size = 0x9000, scoped, tag = 'internal scratch']
  %s0 = inlined_call_operand.hbm [shape: f32[2,2,2,128], index: 0, kind: input, shape index: {}]
  %s1 = inlined_call_operand.hbm [shape: f32[2,2,2,128], index: 1, kind: output, shape index: {}]
  %s2 = sld [smem:[#allocation0]]
  $region41: #{tpu_custom_call.1} parent=0
    _
  %s4 = ssub.s32 1, %s2
  %s5 = scalar_select 0, %s4, %s2
  $region1: #{tpu_custom_call.1} parent=0
    #allocation2 [shape = 'u8[4096]{0}', space=vmem, size = 0x1000, scoped, tag = 'input window, operand 0']
    #allocation3 [shape = 's32[2]{0}', space=sflag, size = 0x8, scoped, tag = 'scoped memory for tpu_custom_call.1']
    #allocation4 [shape = 's32[2]{0}', space=sflag, size = 0x8, scoped, tag = 'scoped memory for tpu_custom_call.1']
    #allocation5 [shape = 'u8[4096]{0}', space=vmem, size = 0x1000, scoped, tag = 'output window, operand 0']
    %6 = vsyncpa [#allocation3], 0
    %s7 = scalar_lea.sflag [#allocation3], 1
    %8 = vsyncpa %s7, 0
    %9 = vsyncpa [#allocation4], 0
    %s10 = scalar_lea.sflag [#allocation4], 1
    %11 = vsyncpa %s10, 0
    loop: start=0, step=1, limit=4
    $region2: #{tpu_custom_call.1} parent=1 // loop_pre_header
      _
    $region3: #{tpu_custom_call.1} parent=1 // loop_header
      %s13 = sphi 0, %s17
      %p14 = scmp.ge.s32.totalorder %s13, 4
      %s20 = sphi 0, %s32
      %s21 = sphi 0, %s28
      %s22 = sphi 0, %s20
      %s23 = sphi 0, %s21
      %s24 = sphi 0, %s22
      %s25 = sphi 0, %s23
      %s37 = sphi 0, %s39
      %s40 = sphi 0, %s37
      %s41 = sphi 0, %s40
      %s57 = sphi 0, %s41
      %s65 = sphi 0, %s67
      %s68 = sphi 0, %s65
      %s69 = sphi 0, %s68
      %s85 = sphi 0, %s69
    $region4: #{tpu_custom_call.1} parent=1 // loop_header_branch
      %16 = sbr.rel (%p14) target = $region8
    $region5: #{tpu_custom_call.1} parent=1 // loop_body
      %s18 = ssub.s32 %s13, 1
      %s19 = ssub.s32 %s13, 2
      %s26 = sadd.s32 1, %s21
      %p27 = scmp.ge.s32.totalorder %s26, 1
      %s28 = scalar_select %p27, 0, %s26
      %s29 = sadd.s32 1, %s20
      %s30 = scalar_select %p27, %s29, %s20
      %p31 = scmp.ge.s32.totalorder %s30, 2
      %s32 = scalar_select %p31, 0, %s30
      %s33 = ssub.s32 %s20, %s32
      %s34 = ssub.s32 %s21, %s28
      %s35 = sor.u32 %s33, %s34
      %p36 = scmp.eq.s32.totalorder %s35, 0
      %s38 = sadd.s32 %s37, 1
      %s39 = scalar_select %p36, %s37, %s38
      %p42 = pneg %p36
      %p43 = scmp.eq.s32.totalorder %s13, 1
      %p44 = por %p42, %p43
      %p45 = scmp.ne.s32.totalorder %s37, %s40
      %p46 = scmp.eq.s32.totalorder %s13, 0
      %p47 = por %p45, %p46
      %p48 = scmp.ne.s32.totalorder %s37, %s40
      %p49 = scmp.eq.s32.totalorder %s18, 1
      %p50 = por %p48, %p49
      %p51 = scmp.ne.s32.totalorder %s40, %s41
      %p52 = scmp.eq.s32.totalorder %s18, 0
      %p53 = por %p51, %p52
      %p54 = scmp.ne.s32.totalorder %s40, %s41
      %p55 = scmp.eq.s32.totalorder %s19, 1
      %p56 = por %p54, %p55
      %p58 = scmp.ne.s32.totalorder %s41, %s57
      %p59 = scmp.eq.s32.totalorder %s19, 0
      %p60 = por %p58, %p59
      %s61 = ssub.s32 %s20, %s32
      %s62 = ssub.s32 %s21, %s28
      %s63 = sor.u32 %s61, %s62
      %p64 = scmp.eq.s32.totalorder %s63, 0
      %s66 = sadd.s32 %s65, 1
      %s67 = scalar_select %p64, %s65, %s66
      %p70 = pneg %p64
      %p71 = scmp.eq.s32.totalorder %s13, 1
      %p72 = por %p70, %p71
      %p73 = scmp.ne.s32.totalorder %s65, %s68
      %p74 = scmp.eq.s32.totalorder %s13, 0
      %p75 = por %p73, %p74
      %p76 = scmp.ne.s32.totalorder %s65, %s68
      %p77 = scmp.eq.s32.totalorder %s18, 1
      %p78 = por %p76, %p77
      %p79 = scmp.ne.s32.totalorder %s68, %s69
      %p80 = scmp.eq.s32.totalorder %s18, 0
      %p81 = por %p79, %p80
      %p82 = scmp.ne.s32.totalorder %s68, %s69
      %p83 = scmp.eq.s32.totalorder %s19, 1
      %p84 = por %p82, %p83
      %p86 = scmp.ne.s32.totalorder %s69, %s85
      %p87 = scmp.eq.s32.totalorder %s19, 0
      %p88 = por %p86, %p87
      %p89 = scmp.le.s32.totalorder 1, %s13
      %p90 = scmp.lt.s32.totalorder %s13, 3
      %p91 = pnand %p89, %p90
      %p92 = pneg %p91
      // Predicated region
      $region9: #{tpu_custom_call.1} parent=5 // pred_check
        _
      $region10: #{tpu_custom_call.1} parent=5 // pred_check_branch
        %94 = sbr.rel (%p91) target = $region12
      $region11: #{tpu_custom_call.1} parent=5 // pred_region
        %s95 = ssub.s32 %s13, 1
      $region12: #{tpu_custom_call.1} parent=5 // pred_fallthru
        _
      %p96 = scmp.lt.s32.totalorder %s13, 2
      // Predicated region
      $region13: #{tpu_custom_call.1} parent=5 // pred_check
        %p97 = pneg %p96
      $region14: #{tpu_custom_call.1} parent=5 // pred_check_branch
        %99 = sbr.rel (%p97) target = $region16
      $region15: #{tpu_custom_call.1} parent=5 // pred_region
        // Predicated region
        $region17: #{tpu_custom_call.1} parent=15 // pred_check
          %p100 = pneg %p47
        $region18: #{tpu_custom_call.1} parent=15 // pred_check_branch
          %102 = sbr.rel (%p100) target = $region20
        $region19: #{tpu_custom_call.1} parent=15 // pred_region
          %s103 = sand.u32 %s37, 1
          %s104 = scalar_lea.sflag [#allocation3], %s103
          %s105 = sand.u32 %s37, 1
          %s106 = smul.addr %s105, 4
          %s107 = scalar_lea.vmem [#allocation2], %s106
          %109 = vsyncadd %s104, 0
          %s110 = smul.addr %s20, 2
          %s111 = sadd.s32 %s21, %s110
          %s112 = smul.addr %s111, 2
          %s113 = scalar_lea.hbm %s0, %s112
          %s114 = sshll.u32 %s113, 4
          %s115 = int_to_ptr.hbm [resolvable:$true] %s114
          %s116 = sshll.u32 %s107, 4
          %s117 = int_to_ptr.vmem [resolvable:$true] %s116
          %122 = dma.hbm_to_vmem [thread:$0]  %s115, 64, %s117, %s104, 32, 32, 2
        $region20: #{tpu_custom_call.1} parent=15 // pred_fallthru
          _
      $region16: #{tpu_custom_call.1} parent=5 // pred_fallthru
        _
      %p123 = scmp.le.s32.totalorder 1, %s13
      %p124 = scmp.lt.s32.totalorder %s13, 3
      %p125 = pnand %p123, %p124
      %p126 = pneg %p125
      // Predicated region
      $region21: #{tpu_custom_call.1} parent=5 // pred_check
        _
      $region22: #{tpu_custom_call.1} parent=5 // pred_check_branch
        %128 = sbr.rel (%p125) target = $region24
      $region23: #{tpu_custom_call.1} parent=5 // pred_region
        %s129 = ssub.s32 %s13, 1
        %s130 = sand.u32 %s40, 1
        %s131 = scalar_lea.sflag [#allocation3], %s130
        %s132 = sand.u32 %s40, 1
        %s133 = smul.addr %s132, 4
        %s134 = scalar_lea.vmem [#allocation2], %s133
        // Predicated region
        $region25: #{tpu_custom_call.1} parent=23 // pred_check
          %p135 = pneg %p53
        $region26: #{tpu_custom_call.1} parent=23 // pred_check_branch
          %137 = sbr.rel (%p135) target = $region28
        $region27: #{tpu_custom_call.1} parent=23 // pred_region
          %139 = dma.done %s131, 64
        $region28: #{tpu_custom_call.1} parent=23 // pred_fallthru
          _
        %s140 = sand.u32 %s40, 1
        %s141 = scalar_lea.sflag [#allocation3], %s140
        %s142 = sand.u32 %s40, 1
        %s143 = smul.addr %s142, 4
        %s144 = scalar_lea.vmem [#allocation2], %s143
        %p145 = pneg %p53
        %p146 = pneg %p50
        %p147 = pneg %p81
        %p148 = pneg %p78
        %s149 = sand.u32 %s68, 1
        %s150 = scalar_lea.sflag [#allocation4], %s149
        %s151 = sand.u32 %s68, 1
        %s152 = smul.addr %s151, 4
        %s153 = scalar_lea.vmem [#allocation5], %s152
        %v154 = vld [vmem:[%s134] sm:$0x3]
        %v155 = vld [vmem:[%s134 + $0x2] sm:$0x3]
        %v156 = vmul.f32 %v154, %v154
        %v157 = vmul.f32 %v155, %v155
        %vm158 = vcmask 1041408
        %v159 = vsel %vm158, %v156, 0.0
        %v160 = vsel %vm158, %v157, 0.0
        %v161 = vadd.f32 %v159, %v160
        %v162 = vrsqrt.pop %v161
        %v163 = vmul.f32 %v162, %v161
        %v164 = vmul.f32 %v163, %v162
        %v165 = vmul.f32 0.5, %v164
        %v166 = vsub.f32 1.5, %v165
        %v167 = vmul.f32 %v162, %v166
        %v168 = vmul.f32 %v161, %v167
        %vm169 = vcmp.eq.f32.partialorder %v161, inf
        %v170 = vsel %vm169, %v161, %v168
        %vm171 = vcmp.eq.f32.partialorder %v161, 0.0
        %v172 = vand.u32 %v161, 2147483648
        %v173 = vsel %vm171, %v172, %v170
        %v174 = vadd.f32 %v173, 1e-07
        %v175 = vrcp.pop %v174
        %v176 = vmul.f32 %v174, %v175
        %v177 = vsub.f32 1.0, %v176
        %v178 = vmul.f32 %v175, %v177
        %v179 = vadd.f32 %v175, %v178
        %vm180 = vweird.f32 %v174
        %vm181 = vweird.f32 %v175
        %vm182 = vmor %vm180, %vm181
        %v183 = vsel %vm182, %v175, %v179
        %v184 = vand.u32 2147483647, %v174
        %vm185 = vcmp.eq.f32.partialorder %v184, 8.507059e+37
        %v186 = vand.u32 %v174, 2147483648
        %v187 = vor.u32 1.1754944e-38, %v186
        %v188 = vsel %vm185, %v187, %v183
        %v189 = vmul.f32 %v154, %v188
        %v190 = vmul.f32 %v155, %v188
        %191 = vst [vmem:[%s153] sm:$0x3] %v189
        %192 = vst [vmem:[%s153 + $0x2] sm:$0x3] %v190
        %s193 = sand.u32 %s68, 1
        %s194 = scalar_lea.sflag [#allocation4], %s193
        %s195 = sand.u32 %s68, 1
        %s196 = smul.addr %s195, 4
        %s197 = scalar_lea.vmem [#allocation5], %s196
        // Predicated region
        $region29: #{tpu_custom_call.1} parent=23 // pred_check
          %p198 = pneg %p78
        $region30: #{tpu_custom_call.1} parent=23 // pred_check_branch
          %200 = sbr.rel (%p198) target = $region32
        $region31: #{tpu_custom_call.1} parent=23 // pred_region
          %202 = vsyncadd %s194, 0
          %s203 = smul.addr %s22, 2
          %s204 = sadd.s32 %s23, %s203
          %s205 = smul.addr %s204, 2
          %s206 = scalar_lea.hbm %s1, %s205
          %s207 = sshll.u32 %s197, 4
          %s208 = int_to_ptr.vmem [resolvable:$true] %s207
          %s209 = sshll.u32 %s206, 4
          %s210 = int_to_ptr.hbm [resolvable:$true] %s209
          %215 = dma.vmem_to_hbm [thread:$0]  %s208, 64, %s210, %s194, 32, 32, 2
        $region32: #{tpu_custom_call.1} parent=23 // pred_fallthru
          _
      $region24: #{tpu_custom_call.1} parent=5 // pred_fallthru
        _
      %p216 = scmp.le.s32.totalorder 2, %s13
      // Predicated region
      $region33: #{tpu_custom_call.1} parent=5 // pred_check
        %p217 = pneg %p216
      $region34: #{tpu_custom_call.1} parent=5 // pred_check_branch
        %219 = sbr.rel (%p217) target = $region36
      $region35: #{tpu_custom_call.1} parent=5 // pred_region
        %s220 = ssub.s32 %s13, 2
        // Predicated region
        $region37: #{tpu_custom_call.1} parent=35 // pred_check
          %p221 = pneg %p84
        $region38: #{tpu_custom_call.1} parent=35 // pred_check_branch
          %223 = sbr.rel (%p221) target = $region40
        $region39: #{tpu_custom_call.1} parent=35 // pred_region
          %s224 = sand.u32 %s69, 1
          %s225 = scalar_lea.sflag [#allocation4], %s224
          %s226 = sand.u32 %s69, 1
          %s227 = smul.addr %s226, 4
          %s228 = scalar_lea.vmem [#allocation5], %s227
          %230 = dma.done %s225, 64
        $region40: #{tpu_custom_call.1} parent=35 // pred_fallthru
          _
      $region36: #{tpu_custom_call.1} parent=5 // pred_fallthru
        _
    $region6: #{tpu_custom_call.1} parent=1 // loop_footer
      %s17 = sadd.s32 1, %s13
    $region7: #{tpu_custom_call.1} parent=1 // loop_footer_branch
      %12 = sbr.rel target = $region3
    $region8: #{tpu_custom_call.1} parent=1 // loop_exit
      _
    %231 = vsyncpa [#allocation3], 1
    %s232 = scalar_lea.sflag [#allocation3], 1
    %233 = vsyncpa %s232, 1
    %234 = vsyncpa [#allocation4], 1
    %s235 = scalar_lea.sflag [#allocation4], 1
    %236 = vsyncpa %s235, 1

</llo_original>
